<compile_context>
chip_gen: v7x
topology: tpu7x:2x2x1
jax: 0.10.0
libtpu: 0.0.40
codegen_flags: <defaults>
</compile_context>

<pallas_src>
import functools

import jax
import jax.numpy as jnp
from jax import lax
from jax.experimental import pallas as pl
from jax.experimental.pallas import tpu as pltpu


_VMEM_LIMIT_BYTES = 32 * 1024 * 1024      # explicit scoped-VMEM budget (safe on v5e/v6e/v7x)
_RESIDENT_W_BYTES = 4 * 1024 * 1024       # keep weight fully VMEM-resident below this
_RESIDENT_DIN_MAX = 2048                  # ... and only if the contraction dim is modest


# ---------------------------------------------------------------- tile pickers

def _pick_sublane_tile(dim, max_tile):
    """Tile for a second-to-last block dim: multiple of 8 dividing dim, else full dim."""
    t = max_tile
    while t >= 8:
        if t <= dim and dim % t == 0:
            return t
        t //= 2
    return dim


def _pick_lane_tile(dim, max_tile=512):
    """Tile for a last/contraction block dim: multiple of 128 dividing dim, else full dim."""
    t = max_tile
    while t >= 128:
        if t <= dim and dim % t == 0:
            return t
        t //= 2
    return dim


# ------------------------------------------------ fused linear: y = x @ W [+ b]

def _linear_kernel(*refs, has_bias):
    if has_bias:
        x_ref, w_ref, b_ref, o_ref, acc_ref = refs
    else:
        x_ref, w_ref, o_ref, acc_ref = refs
        b_ref = None

    k = pl.program_id(2)

    @pl.when(k == 0)
    def _init():
        acc_ref[...] = jnp.zeros(acc_ref.shape, acc_ref.dtype)

    acc_ref[...] += jnp.dot(x_ref[0], w_ref[...],
                            preferred_element_type=jnp.float32)

    @pl.when(k == pl.num_programs(2) - 1)
    def _done():
        r = acc_ref[...]
        if has_bias:
            r = r + b_ref[...]
        o_ref[0] = r.astype(o_ref.dtype)


def linear(x, w, bias=None, out_dtype=None, tm_max=256):
    """x: [B, L, Din], w: [Din, Nout], bias: [Nout]|[1,Nout]|None -> [B, L, Nout].

    Output is lane-dense (last dim = Nout). Activation is read from HBM once; if the
    weight is small it is kept fully VMEM-resident (constant index_map -> single DMA).
    """
    B, L, Din = x.shape
    Din_w, Nout = w.shape
    assert Din_w == Din
    out_dtype = out_dtype if out_dtype is not None else x.dtype
    tm = _pick_sublane_tile(L, tm_max)

    w_bytes = Din * Nout * w.dtype.itemsize
    if w_bytes <= _RESIDENT_W_BYTES and Din <= _RESIDENT_DIN_MAX:
        tk = Din                      # weight resident, contraction in one dot
    else:
        tk = _pick_lane_tile(Din)     # tile the contraction dim

    grid = (B, L // tm, Din // tk)

    in_specs = [
        pl.BlockSpec((1, tm, tk), lambda b, i, k: (b, i, k)),
        pl.BlockSpec((tk, Nout), lambda b, i, k: (k, 0)),
    ]
    args = [x, w]
    if bias is not None:
        in_specs.append(pl.BlockSpec((1, Nout), lambda b, i, k: (0, 0)))
        args.append(jnp.reshape(bias, (1, Nout)))

    kern = functools.partial(_linear_kernel, has_bias=bias is not None)
    return pl.pallas_call(
        kern,
        out_shape=jax.ShapeDtypeStruct((B, L, Nout), out_dtype),
        grid=grid,
        in_specs=in_specs,
        out_specs=pl.BlockSpec((1, tm, Nout), lambda b, i, k: (b, i, 0)),
        scratch_shapes=[pltpu.VMEM((tm, Nout), jnp.float32)],
        compiler_params=pltpu.CompilerParams(
            dimension_semantics=("parallel", "parallel", "arbitrary"),
            vmem_limit_bytes=_VMEM_LIMIT_BYTES,
        ),
    )(*args)


# -------------------------------------------- flash attention (online softmax)

def _attn_kernel(q_ref, kv_ref, o_ref, m_sc, l_sc, acc_sc, *, heads, dim_head):
    # q_ref: (1, tq, inner)  (scale already folded into Wq)
    # kv_ref: (1, tkv, 2*inner)   columns [0:inner]=K heads, [inner:2*inner]=V heads
    # o_ref: (1, tq, inner)
    # grid = (B, N//tq, M//tkv); last axis is the KV-sequence reduction.
    j = pl.program_id(2)
    inner = heads * dim_head

    @pl.when(j == 0)
    def _init():
        m_sc[...] = jnp.full(m_sc.shape, -jnp.inf, dtype=m_sc.dtype)
        l_sc[...] = jnp.zeros(l_sc.shape, l_sc.dtype)
        acc_sc[...] = jnp.zeros(acc_sc.shape, acc_sc.dtype)

    for h in range(heads):                           # static unroll over heads
        lo = h * dim_head
        q_h = q_ref[0, :, lo:lo + dim_head]                      # (tq, d)
        k_h = kv_ref[0, :, lo:lo + dim_head]                     # (tkv, d)
        v_h = kv_ref[0, :, inner + lo:inner + lo + dim_head]     # (tkv, d)

        # q @ k.T without materializing a transpose; f32 accumulation on the MXU.
        sim = lax.dot_general(q_h, k_h, (((1,), (1,)), ((), ())),
                              preferred_element_type=jnp.float32)  # (tq, tkv)

        m_prev = m_sc[h]                                           # (tq, 1)
        m_new = jnp.maximum(m_prev, jnp.max(sim, axis=-1, keepdims=True))
        alpha = jnp.exp(m_prev - m_new)
        p = jnp.exp(sim - m_new)
        l_sc[h] = alpha * l_sc[h] + jnp.sum(p, axis=-1, keepdims=True)
        pv = lax.dot_general(p.astype(v_h.dtype), v_h,
                             (((1,), (0,)), ((), ())),
                             preferred_element_type=jnp.float32)   # (tq, d)
        acc_sc[h] = alpha * acc_sc[h] + pv
        m_sc[h] = m_new

    @pl.when(j == pl.num_programs(2) - 1)
    def _done():
        # Normalize AFTER the PV matmul: O(tq*d) multiplies per head instead of O(tq*M).
        for h in range(heads):
            lo = h * dim_head
            val = acc_sc[h] * pl.reciprocal(l_sc[h], approx=True)
            o_ref[0, :, lo:lo + dim_head] = val.astype(o_ref.dtype)


def attention(q, kv, *, heads, dim_head, out_dtype=None, tq_max=256, tkv_max=512):
    """q: [B, N, inner]; kv: [B, M, 2*inner] -> [B, N, inner] (lane-dense, heads merged)."""
    B, N, inner = q.shape
    _, M, two_inner = kv.shape
    assert inner == heads * dim_head and two_inner == 2 * inner
    out_dtype = out_dtype if out_dtype is not None else q.dtype

    tq = _pick_sublane_tile(N, tq_max)
    tkv = _pick_sublane_tile(M, tkv_max)
    grid = (B, N // tq, M // tkv)

    kern = functools.partial(_attn_kernel, heads=heads, dim_head=dim_head)
    return pl.pallas_call(
        kern,
        out_shape=jax.ShapeDtypeStruct((B, N, inner), out_dtype),
        grid=grid,
        in_specs=[
            pl.BlockSpec((1, tq, inner), lambda b, i, j: (b, i, 0)),
            pl.BlockSpec((1, tkv, two_inner), lambda b, i, j: (b, j, 0)),
        ],
        out_specs=pl.BlockSpec((1, tq, inner), lambda b, i, j: (b, i, 0)),
        scratch_shapes=[
            pltpu.VMEM((heads, tq, 1), jnp.float32),          # m (running max)
            pltpu.VMEM((heads, tq, 1), jnp.float32),          # l (running denom)
            pltpu.VMEM((heads, tq, dim_head), jnp.float32),   # acc (running PV)
        ],
        compiler_params=pltpu.CompilerParams(
            dimension_semantics=("parallel", "parallel", "arbitrary"),
            vmem_limit_bytes=_VMEM_LIMIT_BYTES,
        ),
    )(q, kv)


# ------------------------------------------------------------ parameter prep

def prepare_params(params, heads):
    """One-time (outside hot path) re-layout of PyTorch-layout weights.

    Input : wq [inner, Dq], wk/wv [inner, Dc], wo [Dq, inner], bo [Dq]
    Output: wq_s [Dq, inner] (softmax scale folded in), wkv [Dc, 2*inner] (K cols then V),
            wo_t [inner, Dq], bo2 [1, Dq]

    Column ordering of `inner` stays PyTorch's '(h d)' head-major layout, so the kernels'
    static lane slices pick out heads directly and no per-head weight re-layout is needed.
    """
    wq, wk, wv, wo, bo = params
    inner = wq.shape[0]
    d = inner // heads
    scale = d ** (-0.5)

    wq_s = (wq.T * scale)                                 # fold scale into Wq
    wkv = jnp.concatenate([wk.T, wv.T], axis=1)           # [Dc, 2*inner]
    wo_t = wo.T                                           # [inner, Dq]
    bo2 = bo.reshape(1, -1)
    return wq_s, wkv, wo_t, bo2


# ---------------------------------------------------------- forward (hot path)

def cross_attention(x, context, prepared, heads, compute_dtype=None,
                    tm_max=256, tq_max=256, tkv_max=512):
    """x: [B, N, Dq], context: [B, M, Dc] (or None -> x) -> [B, N, Dq]."""
    wq_s, wkv, wo_t, bo2 = prepared
    inner = wq_s.shape[1]
    d = inner // heads
    if context is None:
        context = x

    # Q and fused K/V projections, lane-dense outputs; x / context read from HBM once.
    q = linear(x, wq_s, out_dtype=compute_dtype, tm_max=tm_max)          # [B, N, inner]
    kv = linear(context, wkv, out_dtype=compute_dtype, tm_max=tm_max)    # [B, M, 2*inner]

    # Flash attention over the (already merged-head) layout.
    o = attention(q, kv, heads=heads, dim_head=d, out_dtype=x.dtype,
                  tq_max=tq_max, tkv_max=tkv_max)                        # [B, N, inner]

    # Output projection: one big contraction over inner, Wo kept VMEM-resident.
    return linear(o, wo_t, bias=bo2, tm_max=tm_max)                      # [B, N, Dq]


# ---------------------------------------------------------- pure-JAX reference

def cross_attention_ref(x, context, params, heads):
    B, N, Dq = x.shape
    _, M, Dc = context.shape
    wq, wk, wv, wo, bo = params
    inner = wq.shape[0]
    d = inner // heads
    scale = d ** (-0.5)

    q = x @ wq.T
    k = context @ wk.T
    v = context @ wv.T
    q = q.reshape(B, N, heads, d).transpose(0, 2, 1, 3).reshape(B * heads, N, d)
    k = k.reshape(B, M, heads, d).transpose(0, 2, 1, 3).reshape(B * heads, M, d)
    v = v.reshape(B, M, heads, d).transpose(0, 2, 1, 3).reshape(B * heads, M, d)
    sim = jnp.einsum("bid,bjd->bij", q, k) * scale
    attn = jax.nn.softmax(sim, axis=-1)
    out = jnp.einsum("bij,bjd->bid", attn, v)
    out = out.reshape(B, heads, N, d).transpose(0, 2, 1, 3).reshape(B, N, inner)
    return out @ wo.T + bo


def _check(out, ref, atol, rtol, what):
    if not jnp.allclose(out, ref, atol=atol, rtol=rtol):
        raise AssertionError(
            f"{what}: max abs diff {jnp.max(jnp.abs(out - ref))}")


if __name__ == "__main__":
    # Small shapes consistent with the module.
    B, N, M = 2, 16, 32
    query_dim, context_dim = 32, 48
    heads, dim_head = 2, 16
    inner = heads * dim_head

    key = jax.random.PRNGKey(0)
    kx, kc, k1, k2, k3, k4, k5 = jax.random.split(key, 7)

    x = jax.random.normal(kx, (B, N, query_dim), dtype=jnp.float32)
    context = jax.random.normal(kc, (B, M, context_dim), dtype=jnp.float32)

    # Deterministic synthetic parameters (PyTorch Linear layout [out, in]).
    wq = jax.random.normal(k1, (inner, query_dim), dtype=jnp.float32) * 0.05
    wk = jax.random.normal(k2, (inner, context_dim), dtype=jnp.float32) * 0.05
    wv = jax.random.normal(k3, (inner, context_dim), dtype=jnp.float32) * 0.05
    wo = jax.random.normal(k4, (query_dim, inner), dtype=jnp.float32) * 0.05
    bo = jax.random.normal(k5, (query_dim,), dtype=jnp.float32) * 0.05
    params = (wq, wk, wv, wo, bo)

    prepared = prepare_params(params, heads)
    ref = jax.block_until_ready(cross_attention_ref(x, context, params, heads))

    # 1) Default tiles, f32 compute.
    out = jax.block_until_ready(cross_attention(x, context, prepared, heads))
    assert out.shape == (B, N, query_dim), out.shape
    _check(out, ref, 2e-2, 2e-2, "f32 default tiles")

    # 2) Forced small tiles: exercises the online-softmax KV loop and multi-tile grids.
    out_small = jax.block_until_ready(
        cross_attention(x, context, prepared, heads, tm_max=8, tq_max=8, tkv_max=8))
    _check(out_small, ref, 2e-2, 2e-2, "f32 small tiles")

    # 3) bf16 Q/K/V (halves KV HBM traffic & attention VMEM; recommended on v6e/v7x).
    out_bf16 = jax.block_until_ready(
        cross_attention(x, context, prepared, heads, compute_dtype=jnp.bfloat16))
    _check(out_bf16, ref, 5e-2, 5e-2, "bf16 compute")

    print("KERNEL_OK")
</pallas_src>

<mosaic_0001>
module attributes {stable_mosaic.version = 11 : i64} {
  func.func @_linear_kernel(%arg0: i32, %arg1: i32, %arg2: i32, %arg3: memref<1x16x32xf32, #tpu.memory_space<vmem>>, %arg4: memref<32x32xf32, #tpu.memory_space<vmem>>, %arg5: memref<1x16x32xf32, #tpu.memory_space<vmem>>, %arg6: memref<16x32xf32, #tpu.memory_space<vmem>>) attributes {dimension_semantics = [#tpu.dimension_semantics<parallel>, #tpu.dimension_semantics<parallel>, #tpu.dimension_semantics<arbitrary>], iteration_bounds = array<i64: 2, 1, 1>, scalar_prefetch = 0 : i64, scratch_operands = 1 : i64, tpu.core_type = #tpu.core_type<tc>, window_params = [{transform_indices = @transform_0, window_bounds = array<i64: 1, 16, 32>}, {transform_indices = @transform_1, window_bounds = array<i64: 32, 32>}, {transform_indices = @transform_2, window_bounds = array<i64: 1, 16, 32>}]} {
    %c0_i32 = arith.constant 0 : i32
    %0 = arith.cmpi eq, %arg2, %c0_i32 : i32
    %1 = arith.extui %0 : i1 to i32
    %c0_i32_0 = arith.constant 0 : i32
    %2 = arith.cmpi ne, %1, %c0_i32_0 : i32
    scf.if %2 {
      %cst_11 = arith.constant 0.000000e+00 : f32
      %13 = vector.broadcast %cst_11 : f32 to vector<16x32xf32>
      %c0_12 = arith.constant 0 : index
      %c0_13 = arith.constant 0 : index
      %14 = vector.load %arg6[%c0_12, %c0_13] : memref<16x32xf32, #tpu.memory_space<vmem>>, vector<16x32xf32>
      tpu.vector_store %arg6[%c0_12, %c0_13], %13 {strides = array<i32>} : memref<16x32xf32, #tpu.memory_space<vmem>>, vector<16x32xf32>,
    } else {
    }
    %c0 = arith.constant 0 : index
    %c0_1 = arith.constant 0 : index
    %3 = vector.load %arg6[%c0, %c0_1] : memref<16x32xf32, #tpu.memory_space<vmem>>, vector<16x32xf32>
    %c0_2 = arith.constant 0 : index
    %c0_3 = arith.constant 0 : index
    %c0_4 = arith.constant 0 : index
    %4 = vector.load %arg3[%c0_2, %c0_3, %c0_4] : memref<1x16x32xf32, #tpu.memory_space<vmem>>, vector<1x16x32xf32>
    %5 = vector.shape_cast %4 : vector<1x16x32xf32> to vector<16x32xf32>
    %c0_5 = arith.constant 0 : index
    %c0_6 = arith.constant 0 : index
    %6 = vector.load %arg4[%c0_5, %c0_6] : memref<32x32xf32, #tpu.memory_space<vmem>>, vector<32x32xf32>
    %cst = arith.constant dense<0.000000e+00> : vector<16x32xf32>
    %7 = tpu.matmul %5, %6, %cst {dimension_numbers = #tpu.dot_dimension_numbers<[1], [0], [0], [1], [0, 0, 1, 1], [], []>} : vector<16x32xf32>, vector<32x32xf32>, vector<16x32xf32> -> vector<16x32xf32>
    %8 = arith.addf %3, %7 : vector<16x32xf32>
    %c0_7 = arith.constant 0 : index
    %c0_8 = arith.constant 0 : index
    %9 = vector.load %arg6[%c0_7, %c0_8] : memref<16x32xf32, #tpu.memory_space<vmem>>, vector<16x32xf32>
    tpu.vector_store %arg6[%c0_7, %c0_8], %8 {strides = array<i32>} : memref<16x32xf32, #tpu.memory_space<vmem>>, vector<16x32xf32>,
    %c0_i32_9 = arith.constant 0 : i32
    %10 = arith.cmpi eq, %arg2, %c0_i32_9 : i32
    %11 = arith.extui %10 : i1 to i32
    %c0_i32_10 = arith.constant 0 : i32
    %12 = arith.cmpi ne, %11, %c0_i32_10 : i32
    scf.if %12 {
      %c0_11 = arith.constant 0 : index
      %c0_12 = arith.constant 0 : index
      %13 = vector.load %arg6[%c0_11, %c0_12] : memref<16x32xf32, #tpu.memory_space<vmem>>, vector<16x32xf32>
      %c0_13 = arith.constant 0 : index
      %c0_14 = arith.constant 0 : index
      %c0_15 = arith.constant 0 : index
      %14 = vector.load %arg5[%c0_13, %c0_14, %c0_15] : memref<1x16x32xf32, #tpu.memory_space<vmem>>, vector<1x16x32xf32>
      %15 = vector.shape_cast %14 : vector<1x16x32xf32> to vector<16x32xf32>
      %16 = vector.shape_cast %13 : vector<16x32xf32> to vector<1x16x32xf32>
      tpu.vector_store %arg5[%c0_13, %c0_14, %c0_15], %16 {strides = array<i32>} : memref<1x16x32xf32, #tpu.memory_space<vmem>>, vector<1x16x32xf32>,
    } else {
    }
    return
  }
  func.func @transform_0(%arg0: i32, %arg1: i32, %arg2: i32) -> (i32, i32, i32) {
    %c0_i32 = arith.constant 0 : i32
    return %arg0, %arg1, %arg2 : i32, i32, i32
  }
  func.func @transform_1(%arg0: i32, %arg1: i32, %arg2: i32) -> (i32, i32) {
    %c0_i32 = arith.constant 0 : i32
    %c0_i32_0 = arith.constant 0 : i32
    return %arg2, %c0_i32 : i32, i32
  }
  func.func @transform_2(%arg0: i32, %arg1: i32, %arg2: i32) -> (i32, i32, i32) {
    %c0_i32 = arith.constant 0 : i32
    %c0_i32_0 = arith.constant 0 : i32
    return %arg0, %arg1, %c0_i32 : i32, i32, i32
  }
}

</mosaic_0001>

<llo_original>
// kernel: tpu_custom_call.1
$region0: #{tpu_custom_call.1}
  #allocation0 [shape = 'u32[]', space=smem, size = 0x4, offset = 0x4, fixed_abs, tag = 'smem constant byte address 0x4 - core index']
  #allocation1 [shape = 'u32[144,128]{1,0:T(1,128)}', space=vmem, size = 0x12000, scoped, tag = 'internal scratch']
  #allocation2 [shape = 'f32[16,32]{1,0:T(8,128)}', space=vmem, size = 0x2000, scoped, tag = 'scratch operand']
  %s0 = inlined_call_operand.hbm [shape: f32[2,16,32], index: 0, kind: input, shape index: {}]
  %s1 = inlined_call_operand.hbm [shape: f32[32,32], index: 1, kind: input, shape index: {}]
  %s2 = inlined_call_operand.hbm [shape: f32[2,16,32], index: 2, kind: output, shape index: {}]
  %s3 = sld [smem:[#allocation0]]
  $region57: #{tpu_custom_call.1} parent=0
    _
  %s5 = ssub.s32 1, %s3
  %s6 = scalar_select 0, %s5, %s3
  $region1: #{tpu_custom_call.1} parent=0
    #allocation3 [shape = 'u8[16384]{0}', space=vmem, size = 0x4000, scoped, tag = 'input window, operand 0']
    #allocation4 [shape = 's32[2]{0}', space=sflag, size = 0x8, scoped, tag = 'scoped memory for tpu_custom_call.1']
    #allocation5 [shape = 's32[2]{0}', space=sflag, size = 0x8, scoped, tag = 'scoped memory for tpu_custom_call.1']
    #allocation6 [shape = 'u8[16384]{0}', space=vmem, size = 0x4000, scoped, tag = 'input window, operand 1, single buffered']
    #allocation7 [shape = 's32[1]{0}', space=sflag, size = 0x4, scoped, tag = 'scoped memory for tpu_custom_call.1']
    #allocation8 [shape = 'u8[16384]{0}', space=vmem, size = 0x4000, scoped, tag = 'output window, operand 0']
    %7 = vsyncpa [#allocation4], 0
    %s8 = scalar_lea.sflag [#allocation4], 1
    %9 = vsyncpa %s8, 0
    %10 = vsyncpa [#allocation7], 0
    %11 = vsyncpa [#allocation5], 0
    %s12 = scalar_lea.sflag [#allocation5], 1
    %13 = vsyncpa %s12, 0
    loop: start=0, step=1, limit=4
    $region2: #{tpu_custom_call.1} parent=1 // loop_pre_header
      _
    $region3: #{tpu_custom_call.1} parent=1 // loop_header
      %s15 = sphi 0, %s19
      %p16 = scmp.ge.s32.totalorder %s15, 4
      %s22 = sphi 0, %s41
      %s23 = sphi 0, %s37
      %s24 = sphi 0, %s33
      %s25 = sphi 0, %s22
      %s26 = sphi 0, %s23
      %s27 = sphi 0, %s24
      %s28 = sphi 0, %s25
      %s29 = sphi 0, %s26
      %s30 = sphi 0, %s27
      %s48 = sphi 0, %s50
      %s51 = sphi 0, %s48
      %s52 = sphi 0, %s51
      %s68 = sphi 0, %s52
      %s74 = sphi 0, %s76
      %s77 = sphi 0, %s74
      %s78 = sphi 0, %s77
      %s94 = sphi 0, %s78
      %s102 = sphi 0, %s104
      %s105 = sphi 0, %s102
      %s106 = sphi 0, %s105
      %s122 = sphi 0, %s106
    $region4: #{tpu_custom_call.1} parent=1 // loop_header_branch
      %18 = sbr.rel (%p16) target = $region8
    $region5: #{tpu_custom_call.1} parent=1 // loop_body
      %s20 = ssub.s32 %s15, 1
      %s21 = ssub.s32 %s15, 2
      %s31 = sadd.s32 1, %s24
      %p32 = scmp.ge.s32.totalorder %s31, 1
      %s33 = scalar_select %p32, 0, %s31
      %s34 = sadd.s32 1, %s23
      %s35 = scalar_select %p32, %s34, %s23
      %p36 = scmp.ge.s32.totalorder %s35, 1
      %s37 = scalar_select %p36, 0, %s35
      %s38 = sadd.s32 1, %s22
      %s39 = scalar_select %p36, %s38, %s22
      %p40 = scmp.ge.s32.totalorder %s39, 2
      %s41 = scalar_select %p40, 0, %s39
      %s42 = ssub.s32 %s22, %s41
      %s43 = ssub.s32 %s23, %s37
      %s44 = sor.u32 %s42, %s43
      %s45 = ssub.s32 %s24, %s33
      %s46 = sor.u32 %s44, %s45
      %p47 = scmp.eq.s32.totalorder %s46, 0
      %s49 = sadd.s32 %s48, 1
      %s50 = scalar_select %p47, %s48, %s49
      %p53 = pneg %p47
      %p54 = scmp.eq.s32.totalorder %s15, 1
      %p55 = por %p53, %p54
      %p56 = scmp.ne.s32.totalorder %s48, %s51
      %p57 = scmp.eq.s32.totalorder %s15, 0
      %p58 = por %p56, %p57
      %p59 = scmp.ne.s32.totalorder %s48, %s51
      %p60 = scmp.eq.s32.totalorder %s20, 1
      %p61 = por %p59, %p60
      %p62 = scmp.ne.s32.totalorder %s51, %s52
      %p63 = scmp.eq.s32.totalorder %s20, 0
      %p64 = por %p62, %p63
      %p65 = scmp.ne.s32.totalorder %s51, %s52
      %p66 = scmp.eq.s32.totalorder %s21, 1
      %p67 = por %p65, %p66
      %p69 = scmp.ne.s32.totalorder %s52, %s68
      %p70 = scmp.eq.s32.totalorder %s21, 0
      %p71 = por %p69, %p70
      %s72 = ssub.s32 %s24, %s33
      %p73 = scmp.eq.s32.totalorder %s72, 0
      %s75 = sadd.s32 %s74, 1
      %s76 = scalar_select %p73, %s74, %s75
      %p79 = pneg %p73
      %p80 = scmp.eq.s32.totalorder %s15, 1
      %p81 = por %p79, %p80
      %p82 = scmp.ne.s32.totalorder %s74, %s77
      %p83 = scmp.eq.s32.totalorder %s15, 0
      %p84 = por %p82, %p83
      %p85 = scmp.ne.s32.totalorder %s74, %s77
      %p86 = scmp.eq.s32.totalorder %s20, 1
      %p87 = por %p85, %p86
      %p88 = scmp.ne.s32.totalorder %s77, %s78
      %p89 = scmp.eq.s32.totalorder %s20, 0
      %p90 = por %p88, %p89
      %p91 = scmp.ne.s32.totalorder %s77, %s78
      %p92 = scmp.eq.s32.totalorder %s21, 1
      %p93 = por %p91, %p92
      %p95 = scmp.ne.s32.totalorder %s78, %s94
      %p96 = scmp.eq.s32.totalorder %s21, 0
      %p97 = por %p95, %p96
      %s98 = ssub.s32 %s22, %s41
      %s99 = ssub.s32 %s23, %s37
      %s100 = sor.u32 %s98, %s99
      %p101 = scmp.eq.s32.totalorder %s100, 0
      %s103 = sadd.s32 %s102, 1
      %s104 = scalar_select %p101, %s102, %s103
      %p107 = pneg %p101
      %p108 = scmp.eq.s32.totalorder %s15, 1
      %p109 = por %p107, %p108
      %p110 = scmp.ne.s32.totalorder %s102, %s105
      %p111 = scmp.eq.s32.totalorder %s15, 0
      %p112 = por %p110, %p111
      %p113 = scmp.ne.s32.totalorder %s102, %s105
      %p114 = scmp.eq.s32.totalorder %s20, 1
      %p115 = por %p113, %p114
      %p116 = scmp.ne.s32.totalorder %s105, %s106
      %p117 = scmp.eq.s32.totalorder %s20, 0
      %p118 = por %p116, %p117
      %p119 = scmp.ne.s32.totalorder %s105, %s106
      %p120 = scmp.eq.s32.totalorder %s21, 1
      %p121 = por %p119, %p120
      %p123 = scmp.ne.s32.totalorder %s106, %s122
      %p124 = scmp.eq.s32.totalorder %s21, 0
      %p125 = por %p123, %p124
      %p126 = scmp.le.s32.totalorder 1, %s15
      %p127 = scmp.lt.s32.totalorder %s15, 3
      %p128 = pnand %p126, %p127
      %p129 = pneg %p128
      // Predicated region
      $region9: #{tpu_custom_call.1} parent=5 // pred_check
        _
      $region10: #{tpu_custom_call.1} parent=5 // pred_check_branch
        %131 = sbr.rel (%p128) target = $region12
      $region11: #{tpu_custom_call.1} parent=5 // pred_region
        %s132 = ssub.s32 %s15, 1
        // Predicated region
        $region13: #{tpu_custom_call.1} parent=11 // pred_check
          %p133 = pneg %p90
        $region14: #{tpu_custom_call.1} parent=11 // pred_check_branch
          %135 = sbr.rel (%p133) target = $region16
        $region15: #{tpu_custom_call.1} parent=11 // pred_region
          %s136 = smul.u32 4, %s27
          %s138 = ssub.s32 512, 512
          %139 = vsyncadd [#allocation7], %s138
          %s140 = smul.addr %s136, 128
          %s141 = scalar_lea.hbm %s1, %s140
          %s142 = sshll.u32 [#allocation6], 4
          %s143 = int_to_ptr.vmem [resolvable:$true] %s142
          %148 = dma.hbm_to_vmem [thread:$0]  %s141, 512, %s143, [#allocation7], 128, 128, 8
        $region16: #{tpu_custom_call.1} parent=11 // pred_fallthru
          _
      $region12: #{tpu_custom_call.1} parent=5 // pred_fallthru
        _
      %p149 = scmp.lt.s32.totalorder %s15, 2
      // Predicated region
      $region17: #{tpu_custom_call.1} parent=5 // pred_check
        %p150 = pneg %p149
      $region18: #{tpu_custom_call.1} parent=5 // pred_check_branch
        %152 = sbr.rel (%p150) target = $region20
      $region19: #{tpu_custom_call.1} parent=5 // pred_region
        // Predicated region
        $region21: #{tpu_custom_call.1} parent=19 // pred_check
          %p153 = pneg %p58
        $region22: #{tpu_custom_call.1} parent=19 // pred_check_branch
          %155 = sbr.rel (%p153) target = $region24
        $region23: #{tpu_custom_call.1} parent=19 // pred_region
          %s156 = sand.u32 %s48, 1
          %s157 = scalar_lea.sflag [#allocation4], %s156
          %s158 = sand.u32 %s48, 1
          %s159 = smul.addr %s158, 16
          %s160 = scalar_lea.vmem [#allocation3], %s159
          %s161 = smul.u32 2, %s23
          %s163 = ssub.s32 256, 256
          %164 = vsyncadd %s157, %s163
          %s165 = sadd.s32 %s24, %s161
          %s166 = smul.addr %s22, 2
          %s167 = sadd.s32 %s165, %s166
          %s168 = smul.addr %s167, 128
          %s169 = scalar_lea.hbm %s0, %s168
          %s170 = sshll.u32 %s160, 4
          %s171 = int_to_ptr.vmem [resolvable:$true] %s170
          %176 = dma.hbm_to_vmem [thread:$0]  %s169, 256, %s171, %s157, 128, 128, 8
        $region24: #{tpu_custom_call.1} parent=19 // pred_fallthru
          _
      $region20: #{tpu_custom_call.1} parent=5 // pred_fallthru
        _
      %p177 = scmp.le.s32.totalorder 1, %s15
      %p178 = scmp.lt.s32.totalorder %s15, 3
      %p179 = pnand %p177, %p178
      %p180 = pneg %p179
      // Predicated region
      $region25: #{tpu_custom_call.1} parent=5 // pred_check
        _
      $region26: #{tpu_custom_call.1} parent=5 // pred_check_branch
        %182 = sbr.rel (%p179) target = $region28
      $region27: #{tpu_custom_call.1} parent=5 // pred_region
        %s183 = ssub.s32 %s15, 1
        %s184 = sand.u32 %s51, 1
        %s185 = scalar_lea.sflag [#allocation4], %s184
        %s186 = sand.u32 %s51, 1
        %s187 = smul.addr %s186, 16
        %s188 = scalar_lea.vmem [#allocation3], %s187
        // Predicated region
        $region29: #{tpu_custom_call.1} parent=27 // pred_check
          %p189 = pneg %p64
        $region30: #{tpu_custom_call.1} parent=27 // pred_check_branch
          %191 = sbr.rel (%p189) target = $region32
        $region31: #{tpu_custom_call.1} parent=27 // pred_region
          %192 = dma.done %s185, 256
        $region32: #{tpu_custom_call.1} parent=27 // pred_fallthru
          _
        // Predicated region
        $region33: #{tpu_custom_call.1} parent=27 // pred_check
          %p193 = pneg %p90
        $region34: #{tpu_custom_call.1} parent=27 // pred_check_branch
          %195 = sbr.rel (%p193) target = $region36
        $region35: #{tpu_custom_call.1} parent=27 // pred_region
          %196 = dma.done [#allocation7], 512
        $region36: #{tpu_custom_call.1} parent=27 // pred_fallthru
          _
        %s197 = sand.u32 %s51, 1
        %s198 = scalar_lea.sflag [#allocation4], %s197
        %s199 = sand.u32 %s51, 1
        %s200 = smul.addr %s199, 16
        %s201 = scalar_lea.vmem [#allocation3], %s200
        %p202 = pneg %p64
        %p203 = pneg %p61
        %p204 = pneg %p90
        %p205 = pneg %p87
        %p206 = pneg %p118
        %p207 = pneg %p115
        %s208 = sand.u32 %s105, 1
        %s209 = scalar_lea.sflag [#allocation5], %s208
        %s210 = sand.u32 %s105, 1
        %s211 = smul.addr %s210, 16
        %s212 = scalar_lea.vmem [#allocation8], %s211
        %s213 = smul.u32 2, %s26
        %s214 = smul.u32 4, %s27
        %s215 = smul.u32 2, %s26
        %p216 = scmp.eq.s32.totalorder %s27, 0
        // Predicated region
        $region37: #{tpu_custom_call.1} parent=27 // pred_check
          %p217 = pneg %p216
        $region38: #{tpu_custom_call.1} parent=27 // pred_check_branch
          %219 = sbr.rel (%p217) target = $region40
        $region39: #{tpu_custom_call.1} parent=27 // pred_region
          %vm220 = vcmask 261120
          %221 = vst.msk [vmem:[#allocation2] sm:$0xff] %vm220, 0.0
          %222 = vst.msk [vmem:[#allocation2 + $0x8] sm:$0xff] %vm220, 0.0
        $region40: #{tpu_custom_call.1} parent=27 // pred_fallthru
          _
        %v223 = vld [vmem:[#allocation2] sm:$0xff]
        %v224 = vld [vmem:[#allocation2 + $0x8] sm:$0xff]
        %v225 = vld [vmem:[%s188] sm:$0xff]
        %v226 = vld [vmem:[%s188 + $0x8] sm:$0xff]
        %v227 = vld [vmem:[#allocation6] sm:$0xff]
        %v228 = vld [vmem:[#allocation6 + $0x8] sm:$0xff]
        %v229 = vld [vmem:[#allocation6 + $0x10] sm:$0xff]
        %v230 = vld [vmem:[#allocation6 + $0x18] sm:$0xff]
        %vm231 = vcmask 261120
        %v233 = vsel %vm231, %v225, 0
        %v236 = vsel %vm231, %v226, 0
        %238 = vmatprep.subr.mxu0 0.0
        %239 = vmatpush1.msra.mxu0 %v227
        %240 = vmatprep.subr.mxu0 0.0
        %241 = vmatpush1.msra.mxu0 %v228
        %242 = vmatprep.subr.mxu0 0.0
        %243 = vmatpush1.msra.mxu0 %v229
        %244 = vmatprep.subr.mxu0 0.0
        %245 = vmatpush1.msra.mxu0 %v230
        %246 = vmatprep.subr.mxu0 0.0
        %247 = vmatpush1.msra.mxu0 0.0
        %248 = vmatprep.subr.mxu0 0.0
        %249 = vmatpush1.msra.mxu0 0.0
        %250 = vmatprep.subr.mxu0 0.0
        %251 = vmatpush1.msra.mxu0 0.0
        %252 = vmatprep.subr.mxu0 0.0
        %253 = vmatpush1.msra.mxu0 0.0
        %254 = vmatprep.subr.mxu0 0.0
        %255 = vmatpush1.msra.mxu0 0.0
        %256 = vmatprep.subr.mxu0 0.0
        %257 = vmatpush1.msra.mxu0 0.0
        %258 = vmatprep.subr.mxu0 0.0
        %259 = vmatpush1.msra.mxu0 0.0
        %260 = vmatprep.subr.mxu0 0.0
        %261 = vmatpush1.msra.mxu0 0.0
        %262 = vmatprep.subr.mxu0 0.0
        %263 = vmatpush1.msra.mxu0 0.0
        %264 = vmatprep.subr.mxu0 0.0
        %265 = vmatpush1.msra.mxu0 0.0
        %266 = vmatprep.subr.mxu0 0.0
        %267 = vmatpush1.msra.mxu0 0.0
        %268 = vmatprep.subr.mxu0 0.0
        %269 = vmatpush1.msra.mxu0 0.0
        %270 = vmatprep.subr.mxu0 0.0
        %271 = vmatpush1.msra.mxu0 0.0
        %272 = vmatprep.subr.mxu0 0.0
        %273 = vmatpush1.msra.mxu0 0.0
        %274 = vmatprep.subr.mxu0 0.0
        %275 = vmatpush1.msra.mxu0 0.0
        %276 = vmatprep.subr.mxu0 0.0
        %277 = vmatpush1.msra.mxu0 0.0
        %278 = vmatprep.subr.mxu0 0.0
        %279 = vmatpush1.msra.mxu0 0.0
        %280 = vmatprep.subr.mxu0 0.0
        %281 = vmatpush1.msra.mxu0 0.0
        %282 = vmatprep.subr.mxu0 0.0
        %283 = vmatpush1.msra.mxu0 0.0
        %284 = vmatprep.subr.mxu0 0.0
        %285 = vmatpush1.msra.mxu0 0.0
        %286 = vmatprep.subr.mxu0 0.0
        %287 = vmatpush1.msra.mxu0 0.0
        %288 = vmatprep.subr.mxu0 0.0
        %289 = vmatpush1.msra.mxu0 0.0
        %290 = vmatprep.subr.mxu0 0.0
        %291 = vmatpush1.msra.mxu0 0.0
        %292 = vmatprep.subr.mxu0 0.0
        %293 = vmatpush1.msra.mxu0 0.0
        %294 = vmatprep.subr.mxu0 0.0
        %295 = vmatpush1.msra.mxu0 0.0
        %296 = vmatprep.subr.mxu0 0.0
        %297 = vmatpush1.msra.mxu0 0.0
        %298 = vmatprep.subr.mxu0 0.0
        %299 = vmatpush1.msra.mxu0 0.0
        %300 = vmatprep.subr.mxu0 0.0
        %301 = vmatpush1.msra.mxu0 0.0
        %302 = vmatprep.mubr.f32.mxu0 0.0
        %303 = vmatmul.mubr.f32.gmra.mrb[0].mxu0 %v233
        %v304 = vpop.f32.mrb[0].mxu0
        %v305 = vadd.f32 0.0, %v304
        %v306 = vpop.f32.mrb[0].mxu0
        %307 = vmatprep.mubr.f32.mxu0 0.0
        %308 = vmatmul.mubr.f32.gmra.mrb[0].mxu0 %v236
        %v309 = vpop.f32.mrb[0].mxu0
        %v310 = vadd.f32 0.0, %v309
        %v311 = vpop.f32.mrb[0].mxu0
        %312 = vdwg.mxu0
        %v313 = vadd.f32 %v223, %v305
        %v314 = vadd.f32 %v224, %v310
        %315 = vst.msk [vmem:[#allocation2] sm:$0xff] %vm231, %v313
        %316 = vst.msk [vmem:[#allocation2 + $0x8] sm:$0xff] %vm231, %v314
        // Predicated region
        $region41: #{tpu_custom_call.1} parent=27 // pred_check
          %p317 = pneg %p216
        $region42: #{tpu_custom_call.1} parent=27 // pred_check_branch
          %319 = sbr.rel (%p317) target = $region44
        $region43: #{tpu_custom_call.1} parent=27 // pred_region
          %v320 = vld [vmem:[#allocation2] sm:$0xff]
          %v321 = vld [vmem:[#allocation2 + $0x8] sm:$0xff]
          %322 = vst.msk [vmem:[%s212] sm:$0xff] %vm231, %v320
          %323 = vst.msk [vmem:[%s212 + $0x8] sm:$0xff] %vm231, %v321
        $region44: #{tpu_custom_call.1} parent=27 // pred_fallthru
          _
        %s324 = sand.u32 %s105, 1
        %s325 = scalar_lea.sflag [#allocation5], %s324
        %s326 = sand.u32 %s105, 1
        %s327 = smul.addr %s326, 16
        %s328 = scalar_lea.vmem [#allocation8], %s327
        // Predicated region
        $region45: #{tpu_custom_call.1} parent=27 // pred_check
          %p329 = pneg %p115
        $region46: #{tpu_custom_call.1} parent=27 // pred_check_branch
          %331 = sbr.rel (%p329) target = $region48
        $region47: #{tpu_custom_call.1} parent=27 // pred_region
          %s332 = smul.u32 2, %s26
          %s334 = ssub.s32 256, 256
          %335 = vsyncadd %s325, %s334
          %s336 = smul.addr %s25, 2
          %s337 = sadd.s32 %s332, %s336
          %s338 = smul.addr %s337, 128
          %s339 = scalar_lea.hbm %s2, %s338
          %s340 = sshll.u32 %s328, 4
          %s341 = int_to_ptr.vmem [resolvable:$true] %s340
          %346 = dma.vmem_to_hbm [thread:$0]  %s341, 256, %s339, %s325, 128, 128, 8
        $region48: #{tpu_custom_call.1} parent=27 // pred_fallthru
          _
      $region28: #{tpu_custom_call.1} parent=5 // pred_fallthru
        _
      %p347 = scmp.le.s32.totalorder 2, %s15
      // Predicated region
      $region49: #{tpu_custom_call.1} parent=5 // pred_check
        %p348 = pneg %p347
      $region50: #{tpu_custom_call.1} parent=5 // pred_check_branch
        %350 = sbr.rel (%p348) target = $region52
      $region51: #{tpu_custom_call.1} parent=5 // pred_region
        %s351 = ssub.s32 %s15, 2
        // Predicated region
        $region53: #{tpu_custom_call.1} parent=51 // pred_check
          %p352 = pneg %p121
        $region54: #{tpu_custom_call.1} parent=51 // pred_check_branch
          %354 = sbr.rel (%p352) target = $region56
        $region55: #{tpu_custom_call.1} parent=51 // pred_region
          %s355 = sand.u32 %s106, 1
          %s356 = scalar_lea.sflag [#allocation5], %s355
          %s357 = sand.u32 %s106, 1
          %s358 = smul.addr %s357, 16
          %s359 = scalar_lea.vmem [#allocation8], %s358
          %360 = dma.done %s356, 256
        $region56: #{tpu_custom_call.1} parent=51 // pred_fallthru
          _
      $region52: #{tpu_custom_call.1} parent=5 // pred_fallthru
        _
    $region6: #{tpu_custom_call.1} parent=1 // loop_footer
      %s19 = sadd.s32 1, %s15
    $region7: #{tpu_custom_call.1} parent=1 // loop_footer_branch
      %14 = sbr.rel target = $region3
    $region8: #{tpu_custom_call.1} parent=1 // loop_exit
      _
    %361 = vsyncpa [#allocation4], 1
    %s362 = scalar_lea.sflag [#allocation4], 1
    %363 = vsyncpa %s362, 1
    %364 = vsyncpa [#allocation7], 1
    %365 = vsyncpa [#allocation5], 1
    %s366 = scalar_lea.sflag [#allocation5], 1
    %367 = vsyncpa %s366, 1

</llo_original>
